<compile_context>
chip_gen: v7x
topology: tpu7x:2x2x1
jax: 0.10.0
libtpu: 0.0.40
codegen_flags: <defaults>
</compile_context>

<pallas_src>
import jax
import jax.numpy as jnp
from jax.experimental import pallas as pl
from jax.experimental.pallas import tpu as pltpu


def _round_up(n, m):
    return ((n + m - 1) // m) * m


def _make_seq_kernel(TS, BP, HP, OP, HO, T, mxu_dtype):
    """TS timesteps per grid step; hidden carry lives in hout_ref."""
    use_step_guard = (T % TS) != 0
    f32_mxu = (mxu_dtype == jnp.float32)

    def kernel(xproj_ref, h0_ref, wh_ref, b_ref, mask_ref, out_ref, hout_ref):
        gt = pl.program_id(0)

        # hout_ref has a constant index_map -> VMEM-resident across the whole
        # grid; it doubles as the hidden-state carry of the recurrence.
        @pl.when(gt == 0)
        def _():
            hout_ref[...] = h0_ref[...]

        wh = wh_ref[...]                                     # (HP, HO) mxu_dtype
        # Loop-invariant broadcasts hoisted out of the unrolled time loop.
        bias = jnp.broadcast_to(b_ref[...], (BP, HO))        # f32, exact
        mask = jnp.broadcast_to(mask_ref[...], (BP, OP))     # 0 / -1e30 additive

        def step(i, h):
            # Serial part only: h @ W_h (single fused GEMM for both heads).
            if f32_mxu:
                hw = jnp.dot(h, wh, preferred_element_type=jnp.float32,
                             precision=jax.lax.Precision.HIGHEST)
            else:
                hw = jnp.dot(h.astype(mxu_dtype), wh,
                             preferred_element_type=jnp.float32)
            lin = hw + bias + xproj_ref[i].astype(jnp.float32)

            # Lane-aligned split: hidden head lanes [0, HP), output head [HP, HP+OP).
            h_new = jnp.tanh(lin[:, :HP])
            o = jnp.tanh(lin[:, HP:]) + mask                 # padded lanes -> -1e30
            o_max = jnp.max(o, axis=1, keepdims=True)
            o_shift = o - o_max
            lse = jnp.log(jnp.sum(jnp.exp(o_shift), axis=1, keepdims=True))
            out_ref[i] = o_shift - lse                       # lane-dense store

            if use_step_guard:
                # Padded tail timesteps must not advance the hidden state.
                t_global = gt * TS + i
                h_new = jnp.where(t_global < T, h_new, h)
            return h_new

        hout_ref[...] = jax.lax.fori_loop(0, TS, step, hout_ref[...],
                                          unroll=True)

    return kernel


def _fused_padded_params(w_i2h, b_i2h, w_i2o, b_i2o, I, H, O, HP, OP):
    """Fuse i2h / i2o into one weight, split x-part / h-part, pad to lane tiles."""
    HO = HP + OP
    w_x = jnp.zeros((I, HO), jnp.float32)
    w_x = w_x.at[:, :H].set(w_i2h[:I, :].astype(jnp.float32))
    w_x = w_x.at[:, HP:HP + O].set(w_i2o[:I, :].astype(jnp.float32))
    w_h = jnp.zeros((HP, HO), jnp.float32)
    w_h = w_h.at[:H, :H].set(w_i2h[I:, :].astype(jnp.float32))
    w_h = w_h.at[:H, HP:HP + O].set(w_i2o[I:, :].astype(jnp.float32))
    b = jnp.zeros((1, HO), jnp.float32)
    b = b.at[:, :H].set(jnp.reshape(b_i2h, (1, H)).astype(jnp.float32))
    b = b.at[:, HP:HP + O].set(jnp.reshape(b_i2o, (1, O)).astype(jnp.float32))
    return w_x, w_h, b


def rnn_forward_sequence(x_seq, h0, w_i2h, b_i2h, w_i2o, b_i2o,
                         *, time_block=16, mxu_dtype=jnp.bfloat16):
    """Run the RNN cell over a whole sequence in ONE pallas_call.

    x_seq : (T, B, I)   h0 : (B, H)
    Weights in JAX layout (y = x @ W + b):  w_i2h : (I+H, H), w_i2o : (I+H, O).
    Returns (log_softmax outputs (T, B, O), final hidden (B, H)).
    """
    T, B, I = x_seq.shape
    H = h0.shape[1]
    O = w_i2o.shape[1]

    HP = _round_up(H, 128)   # hidden head lanes
    OP = _round_up(O, 128)   # output head lanes
    BP = _round_up(B, 8)     # sublane-aligned batch
    HO = HP + OP

    TS = min(T, time_block)  # timesteps per grid step
    TP = _round_up(T, TS)
    n_blocks = TP // TS

    w_x, w_h, b = _fused_padded_params(w_i2h, b_i2h, w_i2o, b_i2o, I, H, O, HP, OP)
    w_h = w_h.astype(mxu_dtype)   # VMEM-resident recurrent weight (bf16 halves footprint)

    # Input-dependent projection for ALL timesteps: one big (T*B, I) @ (I, HO)
    # XLA matmul, precision scoped here (no global config flip).  Streamed to
    # the kernel in mxu_dtype; the exact f32 bias is added in-kernel.
    xproj = jnp.dot(x_seq.reshape(T * B, I).astype(jnp.float32), w_x,
                    precision=jax.lax.Precision.HIGHEST,
                    preferred_element_type=jnp.float32).reshape(T, B, HO)
    xproj = xproj.astype(mxu_dtype)
    xproj = jnp.pad(xproj, ((0, TP - T), (0, BP - B), (0, 0)))

    h0_pad = jnp.zeros((BP, HP), jnp.float32).at[:B, :H].set(h0.astype(jnp.float32))

    # Additive log-softmax mask for padded output lanes (grid-invariant input,
    # replaces per-step iota/compare/select).
    mask = jnp.zeros((1, OP), jnp.float32)
    if OP > O:
        mask = mask.at[:, O:].set(-1e30)

    kernel = _make_seq_kernel(TS, BP, HP, OP, HO, T, mxu_dtype)

    out_pad, h_pad = pl.pallas_call(
        kernel,
        grid=(n_blocks,),
        in_specs=[
            pl.BlockSpec((TS, BP, HO), lambda t: (t, 0, 0)),   # x-projection slab
            pl.BlockSpec((BP, HP), lambda t: (0, 0)),          # initial hidden
            pl.BlockSpec((HP, HO), lambda t: (0, 0)),          # fused recurrent weight
            pl.BlockSpec((1, HO), lambda t: (0, 0)),           # f32 bias
            pl.BlockSpec((1, OP), lambda t: (0, 0)),           # log-softmax lane mask
        ],
        out_specs=(
            pl.BlockSpec((TS, BP, OP), lambda t: (t, 0, 0)),   # per-step log-softmax
            pl.BlockSpec((BP, HP), lambda t: (0, 0)),          # final hidden (carry)
        ),
        out_shape=(
            jax.ShapeDtypeStruct((TP, BP, OP), jnp.float32),
            jax.ShapeDtypeStruct((BP, HP), jnp.float32),
        ),
        compiler_params=pltpu.CompilerParams(
            dimension_semantics=("arbitrary",)),   # time axis is a true recurrence
    )(xproj, h0_pad, w_h, b, mask)

    return out_pad[:T, :B, :O], h_pad[:B, :H]


def rnn_cell(x, h, w_i2h, b_i2h, w_i2o, b_i2o, **kw):
    """Single-step forward, identical semantics to the PyTorch module's forward()."""
    out_seq, h_new = rnn_forward_sequence(x[None], h, w_i2h, b_i2h, w_i2o, b_i2o, **kw)
    return out_seq[0], h_new


# ----------------------------- pure-JAX references -----------------------------

def reference_cell(x, h, w_i2h, b_i2h, w_i2o, b_i2o):
    combined = jnp.concatenate([x, h], axis=1)
    hi = jnp.dot(combined, w_i2h, precision=jax.lax.Precision.HIGHEST) + b_i2h
    oi = jnp.dot(combined, w_i2o, precision=jax.lax.Precision.HIGHEST) + b_i2o
    h_new = jnp.tanh(hi)
    o = jnp.tanh(oi)
    out = o - jax.scipy.special.logsumexp(o, axis=1, keepdims=True)
    return out, h_new


def reference_sequence(x_seq, h0, w_i2h, b_i2h, w_i2o, b_i2o):
    def step(h, x):
        out, h_new = reference_cell(x, h, w_i2h, b_i2h, w_i2o, b_i2o)
        return h_new, out
    h_final, outs = jax.lax.scan(step, h0, x_seq)
    return outs, h_final


if __name__ == "__main__":
    T, B, I, H, O = 8, 4, 16, 32, 8

    key = jax.random.PRNGKey(0)
    kx, kh, k1, k2, k3, k4 = jax.random.split(key, 6)

    x_seq = jax.random.normal(kx, (T, B, I), dtype=jnp.float32)
    hidden0 = jax.random.normal(kh, (B, H), dtype=jnp.float32)

    # Weights stored transposed vs PyTorch nn.Linear: W_jax = W_torch.T
    w_i2h = jax.random.normal(k1, (I + H, H), dtype=jnp.float32) * 0.1
    b_i2h = jax.random.normal(k2, (1, H), dtype=jnp.float32) * 0.1
    w_i2o = jax.random.normal(k3, (I + H, O), dtype=jnp.float32) * 0.1
    b_i2o = jax.random.normal(k4, (1, O), dtype=jnp.float32) * 0.1

    ref_out1, ref_h1 = reference_cell(x_seq[0], hidden0, w_i2h, b_i2h, w_i2o, b_i2o)
    ref_seq, ref_hf = reference_sequence(x_seq, hidden0, w_i2h, b_i2h, w_i2o, b_i2o)

    # --- single step, bf16-MXU fast path (exactly the PyTorch forward) ---
    out1, h1 = rnn_cell(x_seq[0], hidden0, w_i2h, b_i2h, w_i2o, b_i2o)
    jax.block_until_ready((out1, h1))
    assert jnp.allclose(out1, ref_out1, atol=5e-2, rtol=5e-2)
    assert jnp.allclose(h1, ref_h1, atol=5e-2, rtol=5e-2)

    # --- full sequence fused into one pallas_call, bf16-MXU fast path ---
    out_seq, h_final = rnn_forward_sequence(x_seq, hidden0,
                                            w_i2h, b_i2h, w_i2o, b_i2o)
    jax.block_until_ready((out_seq, h_final))
    assert jnp.allclose(out_seq, ref_seq, atol=5e-2, rtol=5e-2)
    assert jnp.allclose(h_final, ref_hf, atol=5e-2, rtol=5e-2)

    # --- exact-semantics check: f32 MXU path at tight tolerance ---
    out_f32, h_f32 = rnn_forward_sequence(x_seq, hidden0,
                                          w_i2h, b_i2h, w_i2o, b_i2o,
                                          mxu_dtype=jnp.float32)
    jax.block_until_ready((out_f32, h_f32))
    assert jnp.allclose(out_f32, ref_seq, atol=1e-4, rtol=1e-4)
    assert jnp.allclose(h_f32, ref_hf, atol=1e-4, rtol=1e-4)

    # --- ragged T: exercises the time-block remainder guard and the hidden
    #     carry across multiple grid steps (f32 path for a tight check) ---
    T2 = 19
    x2 = jax.random.normal(jax.random.PRNGKey(1), (T2, B, I), dtype=jnp.float32)
    ref2, ref2_hf = reference_sequence(x2, hidden0, w_i2h, b_i2h, w_i2o, b_i2o)
    out2, h2 = rnn_forward_sequence(x2, hidden0, w_i2h, b_i2h, w_i2o, b_i2o,
                                    time_block=16, mxu_dtype=jnp.float32)
    jax.block_until_ready((out2, h2))
    assert jnp.allclose(out2, ref2, atol=1e-4, rtol=1e-4)
    assert jnp.allclose(h2, ref2_hf, atol=1e-4, rtol=1e-4)

    print("KERNEL_OK")
</pallas_src>

<mosaic_0001>
module attributes {stable_mosaic.version = 11 : i64} {
  func.func @kernel(%arg0: i32, %arg1: memref<1x8x256xbf16, #tpu.memory_space<vmem>>, %arg2: memref<8x128xf32, #tpu.memory_space<vmem>>, %arg3: memref<128x256xbf16, #tpu.memory_space<vmem>>, %arg4: memref<1x256xf32, #tpu.memory_space<vmem>>, %arg5: memref<1x128xf32, #tpu.memory_space<vmem>>, %arg6: memref<1x8x128xf32, #tpu.memory_space<vmem>>, %arg7: memref<8x128xf32, #tpu.memory_space<vmem>>) attributes {dimension_semantics = [#tpu.dimension_semantics<arbitrary>], iteration_bounds = array<i64: 1>, scalar_prefetch = 0 : i64, scratch_operands = 0 : i64, tpu.core_type = #tpu.core_type<tc>, window_params = [{transform_indices = @transform_0, window_bounds = array<i64: 1, 8, 256>}, {pipeline_mode = #tpu.pipeline_mode<synchronous>, transform_indices = @transform_1, window_bounds = array<i64: 8, 128>}, {pipeline_mode = #tpu.pipeline_mode<synchronous>, transform_indices = @transform_2, window_bounds = array<i64: 128, 256>}, {pipeline_mode = #tpu.pipeline_mode<synchronous>, transform_indices = @transform_3, window_bounds = array<i64: 1, 256>}, {pipeline_mode = #tpu.pipeline_mode<synchronous>, transform_indices = @transform_4, window_bounds = array<i64: 1, 128>}, {transform_indices = @transform_5, window_bounds = array<i64: 1, 8, 128>}, {pipeline_mode = #tpu.pipeline_mode<synchronous>, transform_indices = @transform_6, window_bounds = array<i64: 8, 128>}]} {
    %c0_i32 = arith.constant 0 : i32
    %0 = arith.cmpi eq, %arg0, %c0_i32 : i32
    %1 = arith.extui %0 : i1 to i32
    %c0_i32_0 = arith.constant 0 : i32
    %2 = arith.cmpi ne, %1, %c0_i32_0 : i32
    scf.if %2 {
      %c0_17 = arith.constant 0 : index
      %c0_18 = arith.constant 0 : index
      %39 = vector.load %arg2[%c0_17, %c0_18] : memref<8x128xf32, #tpu.memory_space<vmem>>, vector<8x128xf32>
      %c0_19 = arith.constant 0 : index
      %c0_20 = arith.constant 0 : index
      %40 = vector.load %arg7[%c0_19, %c0_20] : memref<8x128xf32, #tpu.memory_space<vmem>>, vector<8x128xf32>
      tpu.vector_store %arg7[%c0_19, %c0_20], %39 {strides = array<i32>} : memref<8x128xf32, #tpu.memory_space<vmem>>, vector<8x128xf32>,
    } else {
    }
    %c0 = arith.constant 0 : index
    %c0_1 = arith.constant 0 : index
    %3 = vector.load %arg3[%c0, %c0_1] : memref<128x256xbf16, #tpu.memory_space<vmem>>, vector<128x256xbf16>
    %c0_2 = arith.constant 0 : index
    %c0_3 = arith.constant 0 : index
    %4 = vector.load %arg4[%c0_2, %c0_3] : memref<1x256xf32, #tpu.memory_space<vmem>>, vector<1x256xf32>
    %5 = vector.shape_cast %4 : vector<1x256xf32> to vector<1x256xf32>
    %6 = vector.broadcast %5 : vector<1x256xf32> to vector<8x256xf32>
    %c0_4 = arith.constant 0 : index
    %c0_5 = arith.constant 0 : index
    %7 = vector.load %arg5[%c0_4, %c0_5] : memref<1x128xf32, #tpu.memory_space<vmem>>, vector<1x128xf32>
    %8 = vector.shape_cast %7 : vector<1x128xf32> to vector<1x128xf32>
    %9 = vector.broadcast %8 : vector<1x128xf32> to vector<8x128xf32>
    %c0_6 = arith.constant 0 : index
    %c0_7 = arith.constant 0 : index
    %10 = vector.load %arg7[%c0_6, %c0_7] : memref<8x128xf32, #tpu.memory_space<vmem>>, vector<8x128xf32>
    %c0_i32_8 = arith.constant 0 : i32
    %11 = arith.truncf %10 : vector<8x128xf32> to vector<8x128xbf16>
    %cst = arith.constant dense<0.000000e+00> : vector<8x256xf32>
    %12 = tpu.matmul %11, %3, %cst {dimension_numbers = #tpu.dot_dimension_numbers<[1], [0], [0], [1], [0, 0, 1, 1], [], []>} : vector<8x128xbf16>, vector<128x256xbf16>, vector<8x256xf32> -> vector<8x256xf32>
    %13 = arith.addf %12, %6 : vector<8x256xf32>
    %14 = arith.index_cast %c0_i32_8 : i32 to index
    %c0_9 = arith.constant 0 : index
    %c0_10 = arith.constant 0 : index
    %15 = vector.load %arg1[%14, %c0_9, %c0_10] : memref<1x8x256xbf16, #tpu.memory_space<vmem>>, vector<1x8x256xbf16>
    %16 = vector.shape_cast %15 : vector<1x8x256xbf16> to vector<8x256xbf16>
    %17 = arith.extf %16 : vector<8x256xbf16> to vector<8x256xf32>
    %18 = arith.addf %13, %17 : vector<8x256xf32>
    %19 = vector.extract_strided_slice %18 {offsets = [0, 0], sizes = [8, 128], strides = [1, 1]} : vector<8x256xf32> to vector<8x128xf32>
    %20 = math.tanh %19 : vector<8x128xf32>
    %21 = vector.extract_strided_slice %18 {offsets = [0, 128], sizes = [8, 128], strides = [1, 1]} : vector<8x256xf32> to vector<8x128xf32>
    %22 = math.tanh %21 : vector<8x128xf32>
    %23 = arith.addf %22, %9 : vector<8x128xf32>
    %cst_11 = arith.constant dense<0xFF800000> : vector<8xf32>
    %24 = vector.multi_reduction <maximumf>, %23, %cst_11 [1] : vector<8x128xf32> to vector<8xf32>
    %25 = vector.shape_cast %24 : vector<8xf32> to vector<8x1xf32>
    %26 = vector.broadcast %25 : vector<8x1xf32> to vector<8x128xf32>
    %27 = arith.subf %23, %26 : vector<8x128xf32>
    %28 = math.exp %27 : vector<8x128xf32>
    %cst_12 = arith.constant dense<0.000000e+00> : vector<8xf32>
    %29 = vector.multi_reduction <add>, %28, %cst_12 [1] : vector<8x128xf32> to vector<8xf32>
    %30 = vector.shape_cast %29 : vector<8xf32> to vector<8x1xf32>
    %31 = math.log %30 : vector<8x1xf32>
    %32 = vector.broadcast %31 : vector<8x1xf32> to vector<8x128xf32>
    %33 = arith.subf %27, %32 : vector<8x128xf32>
    %34 = arith.index_cast %c0_i32_8 : i32 to index
    %c0_13 = arith.constant 0 : index
    %c0_14 = arith.constant 0 : index
    %35 = vector.load %arg6[%34, %c0_13, %c0_14] : memref<1x8x128xf32, #tpu.memory_space<vmem>>, vector<1x8x128xf32>
    %36 = vector.shape_cast %35 : vector<1x8x128xf32> to vector<8x128xf32>
    %37 = vector.shape_cast %33 : vector<8x128xf32> to vector<1x8x128xf32>
    tpu.vector_store %arg6[%34, %c0_13, %c0_14], %37 {strides = array<i32>} : memref<1x8x128xf32, #tpu.memory_space<vmem>>, vector<1x8x128xf32>,
    %c1_i32 = arith.constant 1 : i32
    %c0_15 = arith.constant 0 : index
    %c0_16 = arith.constant 0 : index
    %38 = vector.load %arg7[%c0_15, %c0_16] : memref<8x128xf32, #tpu.memory_space<vmem>>, vector<8x128xf32>
    tpu.vector_store %arg7[%c0_15, %c0_16], %20 {strides = array<i32>} : memref<8x128xf32, #tpu.memory_space<vmem>>, vector<8x128xf32>,
    return
  }
  func.func @transform_0(%arg0: i32) -> (i32, i32, i32) {
    %c0_i32 = arith.constant 0 : i32
    %c0_i32_0 = arith.constant 0 : i32
    %c0_i32_1 = arith.constant 0 : i32
    return %arg0, %c0_i32, %c0_i32_0 : i32, i32, i32
  }
  func.func @transform_1(%arg0: i32) -> (i32, i32) {
    %c0_i32 = arith.constant 0 : i32
    %c0_i32_0 = arith.constant 0 : i32
    %c0_i32_1 = arith.constant 0 : i32
    return %c0_i32, %c0_i32_0 : i32, i32
  }
  func.func @transform_2(%arg0: i32) -> (i32, i32) {
    %c0_i32 = arith.constant 0 : i32
    %c0_i32_0 = arith.constant 0 : i32
    %c0_i32_1 = arith.constant 0 : i32
    return %c0_i32, %c0_i32_0 : i32, i32
  }
  func.func @transform_3(%arg0: i32) -> (i32, i32) {
    %c0_i32 = arith.constant 0 : i32
    %c0_i32_0 = arith.constant 0 : i32
    %c0_i32_1 = arith.constant 0 : i32
    return %c0_i32, %c0_i32_0 : i32, i32
  }
  func.func @transform_4(%arg0: i32) -> (i32, i32) {
    %c0_i32 = arith.constant 0 : i32
    %c0_i32_0 = arith.constant 0 : i32
    %c0_i32_1 = arith.constant 0 : i32
    return %c0_i32, %c0_i32_0 : i32, i32
  }
  func.func @transform_5(%arg0: i32) -> (i32, i32, i32) {
    %c0_i32 = arith.constant 0 : i32
    %c0_i32_0 = arith.constant 0 : i32
    %c0_i32_1 = arith.constant 0 : i32
    return %arg0, %c0_i32, %c0_i32_0 : i32, i32, i32
  }
  func.func @transform_6(%arg0: i32) -> (i32, i32) {
    %c0_i32 = arith.constant 0 : i32
    %c0_i32_0 = arith.constant 0 : i32
    %c0_i32_1 = arith.constant 0 : i32
    return %c0_i32, %c0_i32_0 : i32, i32
  }
}

</mosaic_0001>

<llo_original>
// kernel: tpu_custom_call.1
$region0: #{tpu_custom_call.1}
  #allocation0 [shape = 'u32[]', space=smem, size = 0x4, offset = 0x4, fixed_abs, tag = 'smem constant byte address 0x4 - core index']
  #allocation1 [shape = 'u32[144,128]{1,0:T(1,128)}', space=vmem, size = 0x12000, scoped, tag = 'internal scratch']
  %s0 = inlined_call_operand.hbm [shape: bf16[1,8,256], index: 0, kind: input, shape index: {}]
  %s1 = inlined_call_operand.hbm [shape: f32[8,128], index: 1, kind: input, shape index: {}]
  %s2 = inlined_call_operand.hbm [shape: bf16[128,256], index: 2, kind: input, shape index: {}]
  %s3 = inlined_call_operand.vmem [shape: f32[1,256], index: 3, kind: input, shape index: {}]
  %s4 = inlined_call_operand.vmem [shape: f32[1,128], index: 4, kind: input, shape index: {}]
  %s5 = inlined_call_operand.hbm [shape: f32[1,8,128], index: 5, kind: output, shape index: {0}]
  %s6 = inlined_call_operand.hbm [shape: f32[8,128], index: 6, kind: output, shape index: {1}]
  %7 = xla_tuple %s5, %s6
  %s8 = sld [smem:[#allocation0]]
  $region54: #{tpu_custom_call.1} parent=0
    _
  %s10 = ssub.s32 1, %s8
  %s11 = scalar_select 0, %s10, %s8
  $region1: #{tpu_custom_call.1} parent=0
    #allocation2 [shape = 'u8[4096]{0}', space=vmem, size = 0x1000, scoped, tag = 'input window, operand 0, single buffered']
    #allocation3 [shape = 's32[1]{0}', space=sflag, size = 0x4, scoped, tag = 'scoped memory for tpu_custom_call.1']
    #allocation4 [shape = 's32[1]{0}', space=sflag, size = 0x4, scoped, tag = 'scoped memory for tpu_custom_call.1']
    #allocation5 [shape = 'u8[4096]{0}', space=vmem, size = 0x1000, scoped, tag = 'input window, operand 1, single buffered']
    #allocation6 [shape = 's32[1]{0}', space=sflag, size = 0x4, scoped, tag = 'scoped memory for tpu_custom_call.1']
    #allocation7 [shape = 'u8[65536]{0}', space=vmem, size = 0x10000, scoped, tag = 'input window, operand 2, single buffered']
    #allocation8 [shape = 'u8[4096]{0}', space=vmem, size = 0x1000, scoped, tag = 'output window, operand 0, single buffered']
    #allocation9 [shape = 'u8[4096]{0}', space=vmem, size = 0x1000, scoped, tag = 'output window, operand 1, single buffered']
    #allocation10 [shape = 's32[1]{0}', space=sflag, size = 0x4, scoped, tag = 'scoped memory for tpu_custom_call.1']
    %12 = vsyncpa [#allocation3], 0
    %13 = vsyncpa [#allocation6], 0
    %14 = vsyncpa [#allocation4], 0
    %15 = vsyncpa [#allocation10], 0
    // Predicated region
    $region2: #{tpu_custom_call.1} parent=1 // pred_check
      _
    $region3: #{tpu_custom_call.1} parent=1 // pred_check_branch
      %17 = sbr.rel (0) target = $region5
    $region4: #{tpu_custom_call.1} parent=1 // pred_region
      %s19 = ssub.s32 128, 128
      %20 = vsyncadd [#allocation3], %s19
      %s22 = sshll.u32 [#allocation2], 4
      %s23 = int_to_ptr.vmem [resolvable:$true] %s22
      %25 = dma.hbm_to_vmem [thread:$0]  %s0, 128, %s23, [#allocation3]
    $region5: #{tpu_custom_call.1} parent=1 // pred_fallthru
      _
    // Predicated region
    $region6: #{tpu_custom_call.1} parent=1 // pred_check
      _
    $region7: #{tpu_custom_call.1} parent=1 // pred_check_branch
      %27 = sbr.rel (0) target = $region9
    $region8: #{tpu_custom_call.1} parent=1 // pred_region
      %s29 = ssub.s32 128, 128
      %30 = vsyncadd [#allocation6], %s29
      %s32 = sshll.u32 [#allocation5], 4
      %s33 = int_to_ptr.vmem [resolvable:$true] %s32
      %35 = dma.hbm_to_vmem [thread:$0]  %s1, 128, %s33, [#allocation6]
    $region9: #{tpu_custom_call.1} parent=1 // pred_fallthru
      _
    // Predicated region
    $region10: #{tpu_custom_call.1} parent=1 // pred_check
      _
    $region11: #{tpu_custom_call.1} parent=1 // pred_check_branch
      %37 = sbr.rel (0) target = $region13
    $region12: #{tpu_custom_call.1} parent=1 // pred_region
      %s39 = ssub.s32 2048, 2048
      %40 = vsyncadd [#allocation6], %s39
      %s41 = sshll.u32 [#allocation7], 4
      %s42 = int_to_ptr.vmem [resolvable:$true] %s41
      %47 = dma.hbm_to_vmem [thread:$0]  %s2, 2048, %s42, [#allocation6], 128, 128, 8
    $region13: #{tpu_custom_call.1} parent=1 // pred_fallthru
      _
    // Predicated region
    $region14: #{tpu_custom_call.1} parent=1 // pred_check
      _
    $region15: #{tpu_custom_call.1} parent=1 // pred_check_branch
      %49 = sbr.rel (0) target = $region17
    $region16: #{tpu_custom_call.1} parent=1 // pred_region
      _
    $region17: #{tpu_custom_call.1} parent=1 // pred_fallthru
      _
    // Predicated region
    $region18: #{tpu_custom_call.1} parent=1 // pred_check
      _
    $region19: #{tpu_custom_call.1} parent=1 // pred_check_branch
      %51 = sbr.rel (0) target = $region21
    $region20: #{tpu_custom_call.1} parent=1 // pred_region
      _
    $region21: #{tpu_custom_call.1} parent=1 // pred_fallthru
      _
    // Predicated region
    $region22: #{tpu_custom_call.1} parent=1 // pred_check
      _
    $region23: #{tpu_custom_call.1} parent=1 // pred_check_branch
      %53 = sbr.rel (0) target = $region25
    $region24: #{tpu_custom_call.1} parent=1 // pred_region
      %54 = dma.done [#allocation3], 128
    $region25: #{tpu_custom_call.1} parent=1 // pred_fallthru
      _
    // Predicated region
    $region26: #{tpu_custom_call.1} parent=1 // pred_check
      _
    $region27: #{tpu_custom_call.1} parent=1 // pred_check_branch
      %56 = sbr.rel (0) target = $region29
    $region28: #{tpu_custom_call.1} parent=1 // pred_region
      %57 = dma.done [#allocation6], 128
    $region29: #{tpu_custom_call.1} parent=1 // pred_fallthru
      _
    // Predicated region
    $region30: #{tpu_custom_call.1} parent=1 // pred_check
      _
    $region31: #{tpu_custom_call.1} parent=1 // pred_check_branch
      %59 = sbr.rel (0) target = $region33
    $region32: #{tpu_custom_call.1} parent=1 // pred_region
      %60 = dma.done [#allocation6], 2048
    $region33: #{tpu_custom_call.1} parent=1 // pred_fallthru
      _
    %p62 = scmp.eq.s32.totalorder 0, 0
    // Predicated region
    $region34: #{tpu_custom_call.1} parent=1 // pred_check
      %p63 = pneg %p62
    $region35: #{tpu_custom_call.1} parent=1 // pred_check_branch
      %65 = sbr.rel (%p63) target = $region37
    $region36: #{tpu_custom_call.1} parent=1 // pred_region
      %v66 = vld [vmem:[#allocation5] sm:$0xff]
      %67 = vst [vmem:[#allocation9] sm:$0xff] %v66
    $region37: #{tpu_custom_call.1} parent=1 // pred_fallthru
      _
    %v68 = vld [vmem:[#allocation7] sm:$0xff]
    %v69 = vld [vmem:[#allocation7 + $0x8] sm:$0xff]
    %v70 = vld [vmem:[#allocation7 + $0x10] sm:$0xff]
    %v71 = vld [vmem:[#allocation7 + $0x18] sm:$0xff]
    %v72 = vld [vmem:[#allocation7 + $0x20] sm:$0xff]
    %v73 = vld [vmem:[#allocation7 + $0x28] sm:$0xff]
    %v74 = vld [vmem:[#allocation7 + $0x30] sm:$0xff]
    %v75 = vld [vmem:[#allocation7 + $0x38] sm:$0xff]
    %v76 = vld [vmem:[#allocation7 + $0x40] sm:$0xff]
    %v77 = vld [vmem:[#allocation7 + $0x48] sm:$0xff]
    %v78 = vld [vmem:[#allocation7 + $0x50] sm:$0xff]
    %v79 = vld [vmem:[#allocation7 + $0x58] sm:$0xff]
    %v80 = vld [vmem:[#allocation7 + $0x60] sm:$0xff]
    %v81 = vld [vmem:[#allocation7 + $0x68] sm:$0xff]
    %v82 = vld [vmem:[#allocation7 + $0x70] sm:$0xff]
    %v83 = vld [vmem:[#allocation7 + $0x78] sm:$0xff]
    %v84 = vld [vmem:[%s3] sm:$0x3]
    %v86 = vlaneseq
    %v87 = vshrl.u32 %v86, 7
    %v88 = vsub.s32 0, %v87
    %v89 = vrot.slane %v84, %v88
    %v90 = vlaneseq
    %v91 = vshrl.u32 %v90, 7
    %v92 = vsub.s32 1, %v91
    %v93 = vrot.slane %v84, %v92
    %v96 = vld [vmem:[%s4] sm:$0x1]
    %v98 = vlaneseq
    %v99 = vshrl.u32 %v98, 7
    %v100 = vsub.s32 0, %v99
    %v101 = vrot.slane %v96, %v100
    %v103 = vld [vmem:[#allocation9] sm:$0xff]
    %v104 = vpack.c.bf16 %v103, %v103
    %v121 = vunpack.c.l.b16 %v68
    %v122 = vunpack.c.h.b16 %v68
    %v123 = vunpack.c.l.b16 %v69
    %v124 = vunpack.c.h.b16 %v69
    %v125 = vunpack.c.l.b16 %v70
    %v126 = vunpack.c.h.b16 %v70
    %v127 = vunpack.c.l.b16 %v71
    %v128 = vunpack.c.h.b16 %v71
    %v129 = vunpack.c.l.b16 %v72
    %v130 = vunpack.c.h.b16 %v72
    %v131 = vunpack.c.l.b16 %v73
    %v132 = vunpack.c.h.b16 %v73
    %v133 = vunpack.c.l.b16 %v74
    %v134 = vunpack.c.h.b16 %v74
    %v135 = vunpack.c.l.b16 %v75
    %v136 = vunpack.c.h.b16 %v75
    %v137 = vunpack.c.l.b16 %v76
    %v138 = vunpack.c.h.b16 %v76
    %v139 = vunpack.c.l.b16 %v77
    %v140 = vunpack.c.h.b16 %v77
    %v141 = vunpack.c.l.b16 %v78
    %v142 = vunpack.c.h.b16 %v78
    %v143 = vunpack.c.l.b16 %v79
    %v144 = vunpack.c.h.b16 %v79
    %v145 = vunpack.c.l.b16 %v80
    %v146 = vunpack.c.h.b16 %v80
    %v147 = vunpack.c.l.b16 %v81
    %v148 = vunpack.c.h.b16 %v81
    %v149 = vunpack.c.l.b16 %v82
    %v150 = vunpack.c.h.b16 %v82
    %v151 = vunpack.c.l.b16 %v83
    %v152 = vunpack.c.h.b16 %v83
    %v153 = vpack.c.b16 %v123, %v121
    %v154 = vpack.c.b16 %v124, %v122
    %v155 = vpack.c.b16 %v127, %v125
    %v156 = vpack.c.b16 %v128, %v126
    %v157 = vpack.c.b16 %v131, %v129
    %v158 = vpack.c.b16 %v132, %v130
    %v159 = vpack.c.b16 %v135, %v133
    %v160 = vpack.c.b16 %v136, %v134
    %v161 = vpack.c.b16 %v139, %v137
    %v162 = vpack.c.b16 %v140, %v138
    %v163 = vpack.c.b16 %v143, %v141
    %v164 = vpack.c.b16 %v144, %v142
    %v165 = vpack.c.b16 %v147, %v145
    %v166 = vpack.c.b16 %v148, %v146
    %v167 = vpack.c.b16 %v151, %v149
    %v168 = vpack.c.b16 %v152, %v150
    %185 = vmatprep.subr.bf16.mxu0 %v154
    %186 = vmatpush1.bf16.msra.mxu0 %v153
    %187 = vmatprep.subr.bf16.mxu0 %v156
    %188 = vmatpush1.bf16.msra.mxu0 %v155
    %189 = vmatprep.subr.bf16.mxu0 %v158
    %190 = vmatpush1.bf16.msra.mxu0 %v157
    %191 = vmatprep.subr.bf16.mxu0 %v160
    %192 = vmatpush1.bf16.msra.mxu0 %v159
    %193 = vmatprep.subr.bf16.mxu0 %v162
    %194 = vmatpush1.bf16.msra.mxu0 %v161
    %195 = vmatprep.subr.bf16.mxu0 %v164
    %196 = vmatpush1.bf16.msra.mxu0 %v163
    %197 = vmatprep.subr.bf16.mxu0 %v166
    %198 = vmatpush1.bf16.msra.mxu0 %v165
    %199 = vmatprep.subr.bf16.mxu0 %v168
    %200 = vmatpush1.bf16.msra.mxu0 %v167
    %201 = vmatprep.subr.bf16.mxu0 0
    %202 = vmatpush1.bf16.msra.mxu0 0
    %203 = vmatprep.subr.bf16.mxu0 0
    %204 = vmatpush1.bf16.msra.mxu0 0
    %205 = vmatprep.subr.bf16.mxu0 0
    %206 = vmatpush1.bf16.msra.mxu0 0
    %207 = vmatprep.subr.bf16.mxu0 0
    %208 = vmatpush1.bf16.msra.mxu0 0
    %209 = vmatprep.subr.bf16.mxu0 0
    %210 = vmatpush1.bf16.msra.mxu0 0
    %211 = vmatprep.subr.bf16.mxu0 0
    %212 = vmatpush1.bf16.msra.mxu0 0
    %213 = vmatprep.subr.bf16.mxu0 0
    %214 = vmatpush1.bf16.msra.mxu0 0
    %215 = vmatprep.subr.bf16.mxu0 0
    %216 = vmatpush1.bf16.msra.mxu0 0
    %217 = vmatprep.mubr.bf16.mxu0 0
    %218 = vmatmul.mubr.bf16.gmra.mrb[0].mxu0 %v104
    %v219 = vpop.f32.mrb[0].mxu0
    %v220 = vadd.f32 %v89, %v219
    %v221 = vpop.f32.mrb[0].mxu0
    %v222 = vadd.f32 %v93, %v221
    %v223 = vpop.f32.mrb[0].mxu0
    %v224 = vpop.f32.mrb[0].mxu0
    %225 = vdwg.mxu0
    %v226 = vld [vmem:[#allocation2] sm:$0xff]
    %v227 = vunpack.c.l.bf16 %v226
    %v228 = vunpack.c.h.bf16 %v226
    %v229 = vadd.f32 %v220, %v227
    %v230 = vadd.f32 %v222, %v228
    %v231 = vtanh.pop %v229
    %v232 = vtanh.pop %v230
    %v233 = vadd.f32 %v232, %v101
    %234 = vmax.xlane.f32.xlu0 %v233
    %v235 = vpop.xlane.xlu0 %234
    %v236 = vsub.f32 %v233, %v235
    %v237 = vmul.f32 %v236, 1.442695
    %v238 = vpow.pop %v237
    %239 = vadd.xlane.f32.xlu0 %v238
    %v240 = vpop.xlane.xlu0 %239
    %v241 = vlog2.pop %v240
    %v242 = vmul.f32 %v241, 0.6931472
    %v243 = vsub.f32 %v236, %v242
    %244 = vst [vmem:[#allocation8] sm:$0xff] %v243
    %245 = vst [vmem:[#allocation9] sm:$0xff] %v231
    // Predicated region
    $region38: #{tpu_custom_call.1} parent=1 // pred_check
      _
    $region39: #{tpu_custom_call.1} parent=1 // pred_check_branch
      %247 = sbr.rel (0) target = $region41
    $region40: #{tpu_custom_call.1} parent=1 // pred_region
      %s249 = ssub.s32 128, 128
      %250 = vsyncadd [#allocation4], %s249
      %s252 = sshll.u32 [#allocation8], 4
      %s253 = int_to_ptr.vmem [resolvable:$true] %s252
      %255 = dma.vmem_to_hbm [thread:$0]  %s253, 128, %s5, [#allocation4]
    $region41: #{tpu_custom_call.1} parent=1 // pred_fallthru
      _
    // Predicated region
    $region42: #{tpu_custom_call.1} parent=1 // pred_check
      _
    $region43: #{tpu_custom_call.1} parent=1 // pred_check_branch
      %257 = sbr.rel (0) target = $region45
    $region44: #{tpu_custom_call.1} parent=1 // pred_region
      %s259 = ssub.s32 128, 128
      %260 = vsyncadd [#allocation10], %s259
      %s262 = sshll.u32 [#allocation9], 4
      %s263 = int_to_ptr.vmem [resolvable:$true] %s262
      %265 = dma.vmem_to_hbm [thread:$0]  %s263, 128, %s6, [#allocation10]
    $region45: #{tpu_custom_call.1} parent=1 // pred_fallthru
      _
    // Predicated region
    $region46: #{tpu_custom_call.1} parent=1 // pred_check
      _
    $region47: #{tpu_custom_call.1} parent=1 // pred_check_branch
      %267 = sbr.rel (0) target = $region49
    $region48: #{tpu_custom_call.1} parent=1 // pred_region
      %268 = dma.done [#allocation4], 128
    $region49: #{tpu_custom_call.1} parent=1 // pred_fallthru
      _
    // Predicated region
    $region50: #{tpu_custom_call.1} parent=1 // pred_check
      _
    $region51: #{tpu_custom_call.1} parent=1 // pred_check_branch
      %270 = sbr.rel (0) target = $region53
    $region52: #{tpu_custom_call.1} parent=1 // pred_region
      %271 = dma.done [#allocation10], 128
    $region53: #{tpu_custom_call.1} parent=1 // pred_fallthru
      _
    %272 = vsyncpa [#allocation3], 1
    %273 = vsyncpa [#allocation6], 1
    %274 = vsyncpa [#allocation4], 1
    %275 = vsyncpa [#allocation10], 1

</llo_original>
